<compile_context>
chip_gen: v6e
topology: v6e:2x2x1
jax: 0.10.0
libtpu: 0.0.40
codegen_flags: <defaults>
</compile_context>

<pallas_src>
import math
import functools

import jax
import jax.numpy as jnp
from jax.experimental import pallas as pl
from jax.experimental.pallas import tpu as pltpu


# ---------------------------------------------------------------------------
# Kernel: one grid step processes b_tile batch rows end-to-end:
#   fused QKV projection -> batched causal softmax attention over all
#   (batch_row, head) pairs -> single output projection -> one store.
# Weights are passed pre-transposed so the kernel computes x @ W^T as x @ Wt.
# ---------------------------------------------------------------------------
def _mha_kernel(x_ref, wqkv_ref, bqkv_ref, wo_ref, bo_ref, o_ref, *, num_heads):
    bt, s, d = x_ref.shape
    dh = d // num_heads
    scale = 1.0 / math.sqrt(dh)

    # ---- fused QKV projection: ONE wide MXU matmul (bt*s, d) @ (d, 3d) ----
    x2 = x_ref[...].reshape(bt * s, d)                     # major-dim merge (free)
    qkv = jnp.dot(x2, wqkv_ref[...],
                  preferred_element_type=jnp.float32) + bqkv_ref[...]
    qkv = qkv.reshape(bt, s, 3 * d)                        # major-dim split (free)

    q = qkv[..., 0 * d:1 * d] * scale                      # fold 1/sqrt(dh) into q once
    k = qkv[..., 1 * d:2 * d]
    v = qkv[..., 2 * d:3 * d]

    # ---- head-major packing (values only, no scratch stores): (bt*H, s, dh) ----
    def to_heads(t):                                       # t: (bt, s, d)
        return jnp.stack(
            [t[b, :, h * dh:(h + 1) * dh]
             for b in range(bt) for h in range(num_heads)],
            axis=0)

    qh, kh, vh = to_heads(q), to_heads(k), to_heads(v)     # (bt*H, s, dh)

    # ---- causal mask, built once per grid step, broadcast over batch*heads ----
    row = jax.lax.broadcasted_iota(jnp.int32, (s, s), 0)
    col = jax.lax.broadcasted_iota(jnp.int32, (s, s), 1)
    future = (col > row)[None, :, :]                       # (1, s, s)

    # ---- all heads / packed batch rows in one batched contraction ----
    # (contraction on last dims via einsum; no explicit transpose of k)
    logits = jnp.einsum('bqe,bke->bqk', qh, kh,
                        preferred_element_type=jnp.float32)
    logits = jnp.where(future, -jnp.inf, logits)           # diagonal never masked

    m = jnp.max(logits, axis=-1, keepdims=True)
    e = jnp.exp(logits - m)
    denom = jnp.sum(e, axis=-1, keepdims=True)
    r = pl.reciprocal(denom, approx=True)                  # EUP slot (cheap)
    r = r * (2.0 - denom * r)                              # one Newton step -> f32 accuracy
    p = e * r

    ctx = jnp.einsum('bqk,bke->bqe', p, vh,
                     preferred_element_type=jnp.float32)   # (bt*H, s, dh)

    # ---- merge heads back to (bt*s, d) in-register, single output matmul ----
    rows = [
        jnp.concatenate([ctx[b * num_heads + h] for h in range(num_heads)],
                        axis=-1)                           # (s, d)
        for b in range(bt)
    ]
    merged = jnp.concatenate(rows, axis=0)                 # (bt*s, d)

    out = jnp.dot(merged, wo_ref[...],
                  preferred_element_type=jnp.float32) + bo_ref[...]
    o_ref[...] = out.reshape(bt, s, d).astype(o_ref.dtype)  # single full store


# ---------------------------------------------------------------------------
# Wrapper: packs the PyTorch-style in_proj params into a single (d, 3d)
# weight + (1, 3d) bias, pre-transposes the output weight, and launches a
# batch-tiled parallel grid.
# ---------------------------------------------------------------------------
def mha_forward(x, in_proj_w, in_proj_b, out_proj_w, out_proj_b, num_heads):
    b, s, d = x.shape
    assert d % num_heads == 0

    # in_proj_w is (3d, d) with rows ordered [q; k; v]  =>  x @ in_proj_w.T
    # gives [q | k | v] columns directly: one fused (d, 3d) weight.
    wqkv_t = in_proj_w.T                       # (d, 3d)
    bqkv = in_proj_b.reshape(1, 3 * d)
    wo_t = out_proj_w.T                        # (d, d)
    bo = out_proj_b.reshape(1, d)

    # Pack batch rows per block, but keep >=2 parallel grid steps when possible
    # so both v7x TensorCores get work (b=2 -> b_tile=1, grid=(2,)).
    # TODO(synk): for long sequences, tile the KV axis flash-style instead of
    # materializing full (s, s) logits (matters under v7x's 64 MiB VMEM).
    b_tile = b // 2 if (b >= 2 and b % 2 == 0) else 1
    grid = (b // b_tile,)

    kernel = functools.partial(_mha_kernel, num_heads=num_heads)

    def const_spec(shape):
        # Whole (un-tiled) array, same block every grid step (weights/biases).
        # Note: skipping pipeline_mode=pl.Buffered(1); at these sizes the extra
        # pipeline buffer (~12 KiB) is negligible VMEM.
        return pl.BlockSpec(shape, lambda i: (0,) * len(shape))

    return pl.pallas_call(
        kernel,
        out_shape=jax.ShapeDtypeStruct((b, s, d), x.dtype),
        grid=grid,
        in_specs=[
            pl.BlockSpec((b_tile, s, d), lambda i: (i, 0, 0)),  # x: b_tile rows
            const_spec((d, 3 * d)),                             # fused Wqkv^T
            const_spec((1, 3 * d)),                             # fused bias
            const_spec((d, d)),                                 # Wo^T
            const_spec((1, d)),                                 # bo
        ],
        out_specs=pl.BlockSpec((b_tile, s, d), lambda i: (i, 0, 0)),
        compiler_params=pltpu.CompilerParams(dimension_semantics=("parallel",)),
    )(x, wqkv_t, bqkv, wo_t, bo)


# ---------------------------------------------------------------------------
# Pure-JAX reference (mirrors torch.nn.MultiheadAttention eval forward).
# ---------------------------------------------------------------------------
def mha_reference(x, in_proj_w, in_proj_b, out_proj_w, out_proj_b, num_heads):
    b, s, d = x.shape
    dh = d // num_heads
    qkv = jnp.einsum('bsd,ed->bse', x, in_proj_w) + in_proj_b
    q, k, v = qkv[..., :d], qkv[..., d:2 * d], qkv[..., 2 * d:]

    def split(t):
        return t.reshape(b, s, num_heads, dh).transpose(0, 2, 1, 3)

    q, k, v = split(q), split(k), split(v)
    logits = jnp.einsum('bhqe,bhke->bhqk', q, k) / jnp.sqrt(dh).astype(x.dtype)
    mask = jnp.triu(jnp.ones((s, s), dtype=bool), k=1)
    logits = jnp.where(mask, -jnp.inf, logits)
    p = jax.nn.softmax(logits, axis=-1)
    o = jnp.einsum('bhqk,bhke->bhqe', p, v)
    o = o.transpose(0, 2, 1, 3).reshape(b, s, d)
    return jnp.einsum('bsd,ed->bse', o, out_proj_w) + out_proj_b


if __name__ == "__main__":
    # Small shapes consistent with the module: seq_len=8, d_model=32, h=4, batch=2.
    batch, seq_len, d_model, num_heads = 2, 8, 32, 4
    dropout = 0.0  # TODO(synk): attention-weight dropout (train mode) not implemented; eval semantics only.

    key = jax.random.PRNGKey(0)
    kx, kw_in, kw_out = jax.random.split(key, 3)

    x = jax.random.normal(kx, (batch, seq_len, d_model), dtype=jnp.float32)

    # Deterministic parameter init (xavier-uniform-ish for weights, zero biases,
    # matching nn.MultiheadAttention's parameter shapes).
    limit_in = math.sqrt(6.0 / (d_model + 3 * d_model))
    in_proj_w = jax.random.uniform(kw_in, (3 * d_model, d_model),
                                   minval=-limit_in, maxval=limit_in,
                                   dtype=jnp.float32)
    in_proj_b = jnp.zeros((3 * d_model,), dtype=jnp.float32)
    limit_out = math.sqrt(6.0 / (2 * d_model))
    out_proj_w = jax.random.uniform(kw_out, (d_model, d_model),
                                    minval=-limit_out, maxval=limit_out,
                                    dtype=jnp.float32)
    out_proj_b = jnp.zeros((d_model,), dtype=jnp.float32)

    out = mha_forward(x, in_proj_w, in_proj_b, out_proj_w, out_proj_b, num_heads)
    out = jax.block_until_ready(out)

    ref = mha_reference(x, in_proj_w, in_proj_b, out_proj_w, out_proj_b, num_heads)
    assert out.shape == (batch, seq_len, d_model)
    # Slightly relaxed tolerance vs. before to cover the EUP approx-reciprocal
    # (refined with one Newton step) path in the softmax denominator.
    assert jnp.allclose(out, ref, atol=1e-4, rtol=1e-4), \
        f"max abs err = {jnp.max(jnp.abs(out - ref))}"

    print("KERNEL_OK")
</pallas_src>

<mosaic_0001>
module attributes {stable_mosaic.version = 11 : i64} {
  func.func @_mha_kernel(%arg0: i32, %arg1: memref<1x8x32xf32, #tpu.memory_space<vmem>>, %arg2: memref<32x96xf32, #tpu.memory_space<vmem>>, %arg3: memref<1x96xf32, #tpu.memory_space<vmem>>, %arg4: memref<32x32xf32, #tpu.memory_space<vmem>>, %arg5: memref<1x32xf32, #tpu.memory_space<vmem>>, %arg6: memref<1x8x32xf32, #tpu.memory_space<vmem>>) attributes {dimension_semantics = [#tpu.dimension_semantics<parallel>], iteration_bounds = array<i64: 2>, scalar_prefetch = 0 : i64, scratch_operands = 0 : i64, tpu.core_type = #tpu.core_type<tc>, window_params = [{transform_indices = @transform_0, window_bounds = array<i64: 1, 8, 32>}, {pipeline_mode = #tpu.pipeline_mode<synchronous>, transform_indices = @transform_1, window_bounds = array<i64: 32, 96>}, {pipeline_mode = #tpu.pipeline_mode<synchronous>, transform_indices = @transform_2, window_bounds = array<i64: 1, 96>}, {pipeline_mode = #tpu.pipeline_mode<synchronous>, transform_indices = @transform_3, window_bounds = array<i64: 32, 32>}, {pipeline_mode = #tpu.pipeline_mode<synchronous>, transform_indices = @transform_4, window_bounds = array<i64: 1, 32>}, {transform_indices = @transform_5, window_bounds = array<i64: 1, 8, 32>}]} {
    %c0 = arith.constant 0 : index
    %c0_0 = arith.constant 0 : index
    %c0_1 = arith.constant 0 : index
    %0 = vector.load %arg1[%c0, %c0_0, %c0_1] : memref<1x8x32xf32, #tpu.memory_space<vmem>>, vector<1x8x32xf32>
    %1 = vector.shape_cast %0 : vector<1x8x32xf32> to vector<8x32xf32>
    %c0_2 = arith.constant 0 : index
    %c0_3 = arith.constant 0 : index
    %2 = vector.load %arg2[%c0_2, %c0_3] : memref<32x96xf32, #tpu.memory_space<vmem>>, vector<32x96xf32>
    %cst = arith.constant dense<0.000000e+00> : vector<8x96xf32>
    %3 = tpu.matmul %1, %2, %cst {dimension_numbers = #tpu.dot_dimension_numbers<[1], [0], [0], [1], [0, 0, 1, 1], [], []>} : vector<8x32xf32>, vector<32x96xf32>, vector<8x96xf32> -> vector<8x96xf32>
    %c0_4 = arith.constant 0 : index
    %c0_5 = arith.constant 0 : index
    %4 = vector.load %arg3[%c0_4, %c0_5] : memref<1x96xf32, #tpu.memory_space<vmem>>, vector<1x96xf32>
    %5 = vector.broadcast %4 : vector<1x96xf32> to vector<8x96xf32>
    %6 = arith.addf %3, %5 : vector<8x96xf32>
    %7 = vector.shape_cast %6 : vector<8x96xf32> to vector<1x8x96xf32>
    %8 = vector.extract_strided_slice %7 {offsets = [0, 0, 0], sizes = [1, 8, 32], strides = [1, 1, 1]} : vector<1x8x96xf32> to vector<1x8x32xf32>
    %cst_6 = arith.constant 0.353553385 : f32
    %9 = vector.broadcast %cst_6 : f32 to vector<1x8x32xf32>
    %10 = arith.mulf %8, %9 : vector<1x8x32xf32>
    %11 = vector.extract_strided_slice %7 {offsets = [0, 0, 32], sizes = [1, 8, 32], strides = [1, 1, 1]} : vector<1x8x96xf32> to vector<1x8x32xf32>
    %12 = vector.extract_strided_slice %7 {offsets = [0, 0, 64], sizes = [1, 8, 32], strides = [1, 1, 1]} : vector<1x8x96xf32> to vector<1x8x32xf32>
    %13 = vector.extract_strided_slice %10 {offsets = [0, 0, 0], sizes = [1, 8, 8], strides = [1, 1, 1]} : vector<1x8x32xf32> to vector<1x8x8xf32>
    %14 = vector.shape_cast %13 : vector<1x8x8xf32> to vector<8x8xf32>
    %15 = vector.extract_strided_slice %10 {offsets = [0, 0, 8], sizes = [1, 8, 8], strides = [1, 1, 1]} : vector<1x8x32xf32> to vector<1x8x8xf32>
    %16 = vector.shape_cast %15 : vector<1x8x8xf32> to vector<8x8xf32>
    %17 = vector.extract_strided_slice %10 {offsets = [0, 0, 16], sizes = [1, 8, 8], strides = [1, 1, 1]} : vector<1x8x32xf32> to vector<1x8x8xf32>
    %18 = vector.shape_cast %17 : vector<1x8x8xf32> to vector<8x8xf32>
    %19 = vector.extract_strided_slice %10 {offsets = [0, 0, 24], sizes = [1, 8, 8], strides = [1, 1, 1]} : vector<1x8x32xf32> to vector<1x8x8xf32>
    %20 = vector.shape_cast %19 : vector<1x8x8xf32> to vector<8x8xf32>
    %21 = vector.shape_cast %14 : vector<8x8xf32> to vector<1x8x8xf32>
    %22 = vector.shape_cast %16 : vector<8x8xf32> to vector<1x8x8xf32>
    %23 = vector.shape_cast %18 : vector<8x8xf32> to vector<1x8x8xf32>
    %24 = vector.shape_cast %20 : vector<8x8xf32> to vector<1x8x8xf32>
    %25 = tpu.concatenate %21, %22, %23, %24 in 0 : vector<1x8x8xf32>, vector<1x8x8xf32>, vector<1x8x8xf32>, vector<1x8x8xf32> -> vector<4x8x8xf32>
    %26 = vector.extract_strided_slice %11 {offsets = [0, 0, 0], sizes = [1, 8, 8], strides = [1, 1, 1]} : vector<1x8x32xf32> to vector<1x8x8xf32>
    %27 = vector.shape_cast %26 : vector<1x8x8xf32> to vector<8x8xf32>
    %28 = vector.extract_strided_slice %11 {offsets = [0, 0, 8], sizes = [1, 8, 8], strides = [1, 1, 1]} : vector<1x8x32xf32> to vector<1x8x8xf32>
    %29 = vector.shape_cast %28 : vector<1x8x8xf32> to vector<8x8xf32>
    %30 = vector.extract_strided_slice %11 {offsets = [0, 0, 16], sizes = [1, 8, 8], strides = [1, 1, 1]} : vector<1x8x32xf32> to vector<1x8x8xf32>
    %31 = vector.shape_cast %30 : vector<1x8x8xf32> to vector<8x8xf32>
    %32 = vector.extract_strided_slice %11 {offsets = [0, 0, 24], sizes = [1, 8, 8], strides = [1, 1, 1]} : vector<1x8x32xf32> to vector<1x8x8xf32>
    %33 = vector.shape_cast %32 : vector<1x8x8xf32> to vector<8x8xf32>
    %34 = vector.shape_cast %27 : vector<8x8xf32> to vector<1x8x8xf32>
    %35 = vector.shape_cast %29 : vector<8x8xf32> to vector<1x8x8xf32>
    %36 = vector.shape_cast %31 : vector<8x8xf32> to vector<1x8x8xf32>
    %37 = vector.shape_cast %33 : vector<8x8xf32> to vector<1x8x8xf32>
    %38 = tpu.concatenate %34, %35, %36, %37 in 0 : vector<1x8x8xf32>, vector<1x8x8xf32>, vector<1x8x8xf32>, vector<1x8x8xf32> -> vector<4x8x8xf32>
    %39 = vector.extract_strided_slice %12 {offsets = [0, 0, 0], sizes = [1, 8, 8], strides = [1, 1, 1]} : vector<1x8x32xf32> to vector<1x8x8xf32>
    %40 = vector.shape_cast %39 : vector<1x8x8xf32> to vector<8x8xf32>
    %41 = vector.extract_strided_slice %12 {offsets = [0, 0, 8], sizes = [1, 8, 8], strides = [1, 1, 1]} : vector<1x8x32xf32> to vector<1x8x8xf32>
    %42 = vector.shape_cast %41 : vector<1x8x8xf32> to vector<8x8xf32>
    %43 = vector.extract_strided_slice %12 {offsets = [0, 0, 16], sizes = [1, 8, 8], strides = [1, 1, 1]} : vector<1x8x32xf32> to vector<1x8x8xf32>
    %44 = vector.shape_cast %43 : vector<1x8x8xf32> to vector<8x8xf32>
    %45 = vector.extract_strided_slice %12 {offsets = [0, 0, 24], sizes = [1, 8, 8], strides = [1, 1, 1]} : vector<1x8x32xf32> to vector<1x8x8xf32>
    %46 = vector.shape_cast %45 : vector<1x8x8xf32> to vector<8x8xf32>
    %47 = vector.shape_cast %40 : vector<8x8xf32> to vector<1x8x8xf32>
    %48 = vector.shape_cast %42 : vector<8x8xf32> to vector<1x8x8xf32>
    %49 = vector.shape_cast %44 : vector<8x8xf32> to vector<1x8x8xf32>
    %50 = vector.shape_cast %46 : vector<8x8xf32> to vector<1x8x8xf32>
    %51 = tpu.concatenate %47, %48, %49, %50 in 0 : vector<1x8x8xf32>, vector<1x8x8xf32>, vector<1x8x8xf32>, vector<1x8x8xf32> -> vector<4x8x8xf32>
    %52 = tpu.iota {dimensions = array<i32: 0>} : vector<8x8xi32>
    %53 = tpu.iota {dimensions = array<i32: 1>} : vector<8x8xi32>
    %54 = arith.cmpi sgt, %53, %52 : vector<8x8xi32>
    %55 = vector.shape_cast %54 : vector<8x8xi1> to vector<1x8x8xi1>
    "tpu.trace_start"() <{level = 10 : i32, message = "bqe,bke->bqk"}> : () -> ()
    %cst_7 = arith.constant dense<0.000000e+00> : vector<4x8x8xf32>
    %56 = tpu.matmul %25, %38, %cst_7 {dimension_numbers = #tpu.dot_dimension_numbers<[2], [2], [1], [1], [0, 0, 0, 1, 1, 1], [0], [0]>} : vector<4x8x8xf32>, vector<4x8x8xf32>, vector<4x8x8xf32> -> vector<4x8x8xf32>
    %cst_8 = arith.constant 0xFF800000 : f32
    "tpu.trace_stop"() : () -> ()
    %57 = vector.shape_cast %55 : vector<1x8x8xi1> to vector<1x8x8xi1>
    %58 = vector.broadcast %57 : vector<1x8x8xi1> to vector<4x8x8xi1>
    %59 = vector.broadcast %cst_8 : f32 to vector<4x8x8xf32>
    %60 = arith.select %58, %59, %56 : vector<4x8x8xi1>, vector<4x8x8xf32>
    %cst_9 = arith.constant dense<0xFF800000> : vector<4x8xf32>
    %61 = vector.multi_reduction <maximumf>, %60, %cst_9 [2] : vector<4x8x8xf32> to vector<4x8xf32>
    %62 = vector.shape_cast %61 : vector<4x8xf32> to vector<4x8x1xf32>
    %63 = vector.broadcast %62 : vector<4x8x1xf32> to vector<4x8x8xf32>
    %64 = arith.subf %60, %63 : vector<4x8x8xf32>
    %65 = math.exp %64 : vector<4x8x8xf32>
    %cst_10 = arith.constant dense<0.000000e+00> : vector<4x8xf32>
    %66 = vector.multi_reduction <add>, %65, %cst_10 [2] : vector<4x8x8xf32> to vector<4x8xf32>
    %67 = vector.shape_cast %66 : vector<4x8xf32> to vector<4x8x1xf32>
    %68 = tpu.reciprocal %67 {approx = true} : vector<4x8x1xf32> -> vector<4x8x1xf32>
    %69 = arith.mulf %67, %68 : vector<4x8x1xf32>
    %cst_11 = arith.constant 2.000000e+00 : f32
    %70 = vector.broadcast %cst_11 : f32 to vector<4x8x1xf32>
    %71 = arith.subf %70, %69 : vector<4x8x1xf32>
    %72 = arith.mulf %68, %71 : vector<4x8x1xf32>
    %73 = vector.broadcast %72 : vector<4x8x1xf32> to vector<4x8x8xf32>
    %74 = arith.mulf %65, %73 : vector<4x8x8xf32>
    "tpu.trace_start"() <{level = 10 : i32, message = "bqk,bke->bqe"}> : () -> ()
    %cst_12 = arith.constant dense<0.000000e+00> : vector<4x8x8xf32>
    %75 = tpu.matmul %74, %51, %cst_12 {dimension_numbers = #tpu.dot_dimension_numbers<[2], [1], [1], [2], [0, 0, 0, 1, 1, 2], [0], [0]>} : vector<4x8x8xf32>, vector<4x8x8xf32>, vector<4x8x8xf32> -> vector<4x8x8xf32>
    "tpu.trace_stop"() : () -> ()
    %76 = vector.extract_strided_slice %75 {offsets = [0, 0, 0], sizes = [1, 8, 8], strides = [1, 1, 1]} : vector<4x8x8xf32> to vector<1x8x8xf32>
    %77 = vector.shape_cast %76 : vector<1x8x8xf32> to vector<8x8xf32>
    %78 = vector.extract_strided_slice %75 {offsets = [1, 0, 0], sizes = [1, 8, 8], strides = [1, 1, 1]} : vector<4x8x8xf32> to vector<1x8x8xf32>
    %79 = vector.shape_cast %78 : vector<1x8x8xf32> to vector<8x8xf32>
    %80 = vector.extract_strided_slice %75 {offsets = [2, 0, 0], sizes = [1, 8, 8], strides = [1, 1, 1]} : vector<4x8x8xf32> to vector<1x8x8xf32>
    %81 = vector.shape_cast %80 : vector<1x8x8xf32> to vector<8x8xf32>
    %82 = vector.extract_strided_slice %75 {offsets = [3, 0, 0], sizes = [1, 8, 8], strides = [1, 1, 1]} : vector<4x8x8xf32> to vector<1x8x8xf32>
    %83 = vector.shape_cast %82 : vector<1x8x8xf32> to vector<8x8xf32>
    %84 = tpu.concatenate %77, %79, %81, %83 in 1 : vector<8x8xf32>, vector<8x8xf32>, vector<8x8xf32>, vector<8x8xf32> -> vector<8x32xf32>
    %c0_13 = arith.constant 0 : index
    %c0_14 = arith.constant 0 : index
    %85 = vector.load %arg4[%c0_13, %c0_14] : memref<32x32xf32, #tpu.memory_space<vmem>>, vector<32x32xf32>
    %cst_15 = arith.constant dense<0.000000e+00> : vector<8x32xf32>
    %86 = tpu.matmul %84, %85, %cst_15 {dimension_numbers = #tpu.dot_dimension_numbers<[1], [0], [0], [1], [0, 0, 1, 1], [], []>} : vector<8x32xf32>, vector<32x32xf32>, vector<8x32xf32> -> vector<8x32xf32>
    %c0_16 = arith.constant 0 : index
    %c0_17 = arith.constant 0 : index
    %87 = vector.load %arg5[%c0_16, %c0_17] : memref<1x32xf32, #tpu.memory_space<vmem>>, vector<1x32xf32>
    %88 = vector.broadcast %87 : vector<1x32xf32> to vector<8x32xf32>
    %89 = arith.addf %86, %88 : vector<8x32xf32>
    %90 = vector.shape_cast %89 : vector<8x32xf32> to vector<1x8x32xf32>
    %c0_18 = arith.constant 0 : index
    %c0_19 = arith.constant 0 : index
    %c0_20 = arith.constant 0 : index
    %91 = vector.load %arg6[%c0_18, %c0_19, %c0_20] : memref<1x8x32xf32, #tpu.memory_space<vmem>>, vector<1x8x32xf32>
    tpu.vector_store %arg6[%c0_18, %c0_19, %c0_20], %90 {strides = array<i32>} : memref<1x8x32xf32, #tpu.memory_space<vmem>>, vector<1x8x32xf32>,
    return
  }
  func.func @transform_0(%arg0: i32) -> (i32, i32, i32) {
    %c0_i32 = arith.constant 0 : i32
    %c0_i32_0 = arith.constant 0 : i32
    %c0_i32_1 = arith.constant 0 : i32
    return %arg0, %c0_i32, %c0_i32_0 : i32, i32, i32
  }
  func.func @transform_1(%arg0: i32) -> (i32, i32) {
    %c0_i32 = arith.constant 0 : i32
    %c0_i32_0 = arith.constant 0 : i32
    %c0_i32_1 = arith.constant 0 : i32
    return %c0_i32, %c0_i32_0 : i32, i32
  }
  func.func @transform_2(%arg0: i32) -> (i32, i32) {
    %c0_i32 = arith.constant 0 : i32
    %c0_i32_0 = arith.constant 0 : i32
    %c0_i32_1 = arith.constant 0 : i32
    return %c0_i32, %c0_i32_0 : i32, i32
  }
  func.func @transform_3(%arg0: i32) -> (i32, i32) {
    %c0_i32 = arith.constant 0 : i32
    %c0_i32_0 = arith.constant 0 : i32
    %c0_i32_1 = arith.constant 0 : i32
    return %c0_i32, %c0_i32_0 : i32, i32
  }
  func.func @transform_4(%arg0: i32) -> (i32, i32) {
    %c0_i32 = arith.constant 0 : i32
    %c0_i32_0 = arith.constant 0 : i32
    %c0_i32_1 = arith.constant 0 : i32
    return %c0_i32, %c0_i32_0 : i32, i32
  }
  func.func @transform_5(%arg0: i32) -> (i32, i32, i32) {
    %c0_i32 = arith.constant 0 : i32
    %c0_i32_0 = arith.constant 0 : i32
    %c0_i32_1 = arith.constant 0 : i32
    return %arg0, %c0_i32, %c0_i32_0 : i32, i32, i32
  }
}

</mosaic_0001>

<llo_original>
// kernel: tpu_custom_call.1
$region0: #{tpu_custom_call.1}
  #allocation0 [shape = 'u32[]', space=smem, size = 0x4, offset = 0x4, fixed_abs, tag = 'smem constant byte address 0x4 - core index']
  #allocation1 [shape = 'u32[144,128]{1,0:T(1,128)}', space=vmem, size = 0x12000, scoped, tag = 'internal scratch']
  %s0 = inlined_call_operand.hbm [shape: f32[2,8,32], index: 0, kind: input, shape index: {}]
  %s1 = inlined_call_operand.hbm [shape: f32[32,96], index: 1, kind: input, shape index: {}]
  %s2 = inlined_call_operand.vmem [shape: f32[1,96], index: 2, kind: input, shape index: {}]
  %s3 = inlined_call_operand.hbm [shape: f32[32,32], index: 3, kind: input, shape index: {}]
  %s4 = inlined_call_operand.vmem [shape: f32[1,32], index: 4, kind: input, shape index: {}]
  %s5 = inlined_call_operand.hbm [shape: f32[2,8,32], index: 5, kind: output, shape index: {}]
  %s6 = sld [smem:[#allocation0]]
  $region65: #{tpu_custom_call.1} parent=0
    _
  %s8 = ssub.s32 1, %s6
  %s9 = scalar_select 0, %s8, %s6
  $region1: #{tpu_custom_call.1} parent=0
    #allocation2 [shape = 'u8[8192]{0}', space=vmem, size = 0x2000, scoped, tag = 'input window, operand 0']
    #allocation3 [shape = 's32[2]{0}', space=sflag, size = 0x8, scoped, tag = 'scoped memory for tpu_custom_call.1']
    #allocation4 [shape = 's32[2]{0}', space=sflag, size = 0x8, scoped, tag = 'scoped memory for tpu_custom_call.1']
    #allocation5 [shape = 'u8[16384]{0}', space=vmem, size = 0x4000, scoped, tag = 'input window, operand 1, single buffered']
    #allocation6 [shape = 's32[1]{0}', space=sflag, size = 0x4, scoped, tag = 'scoped memory for tpu_custom_call.1']
    #allocation7 [shape = 'u8[16384]{0}', space=vmem, size = 0x4000, scoped, tag = 'input window, operand 3, single buffered']
    #allocation8 [shape = 'u8[8192]{0}', space=vmem, size = 0x2000, scoped, tag = 'output window, operand 0']
    %10 = vsyncpa [#allocation3], 0
    %s11 = scalar_lea.sflag [#allocation3], 1
    %12 = vsyncpa %s11, 0
    %13 = vsyncpa [#allocation6], 0
    %14 = vsyncpa [#allocation4], 0
    %s15 = scalar_lea.sflag [#allocation4], 1
    %16 = vsyncpa %s15, 0
    loop: start=0, step=1, limit=4
    $region2: #{tpu_custom_call.1} parent=1 // loop_pre_header
      _
    $region3: #{tpu_custom_call.1} parent=1 // loop_header
      %s18 = sphi 0, %s22
      %p19 = scmp.ge.s32.totalorder %s18, 4
      %s28 = sphi 0, %s30
      %s31 = sphi 0, %s28
      %s32 = sphi 0, %s31
      %s48 = sphi 0, %s32
      %s52 = sphi 0, %s52
      %s54 = sphi 0, %s52
      %s55 = sphi 0, %s54
      %s69 = sphi 0, %s55
      %s73 = sphi 0, %s73
      %s75 = sphi 0, %s73
      %s76 = sphi 0, %s75
      %s90 = sphi 0, %s76
      %s94 = sphi 0, %s94
      %s96 = sphi 0, %s94
      %s97 = sphi 0, %s96
      %s111 = sphi 0, %s97
      %s115 = sphi 0, %s115
      %s117 = sphi 0, %s115
      %s118 = sphi 0, %s117
      %s132 = sphi 0, %s118
      %s138 = sphi 0, %s140
      %s141 = sphi 0, %s138
      %s142 = sphi 0, %s141
      %s158 = sphi 0, %s142
    $region4: #{tpu_custom_call.1} parent=1 // loop_header_branch
      %21 = sbr.rel (%p19) target = $region8
    $region5: #{tpu_custom_call.1} parent=1 // loop_body
      %s23 = ssub.s32 %s18, 1
      %s24 = ssub.s32 %s18, 2
      %s25 = sadd.s32 %s18, 1
      %s26 = ssub.s32 %s18, %s25
      %p27 = scmp.eq.s32.totalorder %s26, 0
      %s29 = sadd.s32 %s28, 1
      %s30 = scalar_select %p27, %s28, %s29
      %p33 = pneg %p27
      %p34 = scmp.eq.s32.totalorder %s18, 1
      %p35 = por %p33, %p34
      %p36 = scmp.ne.s32.totalorder %s28, %s31
      %p37 = scmp.eq.s32.totalorder %s18, 0
      %p38 = por %p36, %p37
      %p39 = scmp.ne.s32.totalorder %s28, %s31
      %p40 = scmp.eq.s32.totalorder %s23, 1
      %p41 = por %p39, %p40
      %p42 = scmp.ne.s32.totalorder %s31, %s32
      %p43 = scmp.eq.s32.totalorder %s23, 0
      %p44 = por %p42, %p43
      %p45 = scmp.ne.s32.totalorder %s31, %s32
      %p46 = scmp.eq.s32.totalorder %s24, 1
      %p47 = por %p45, %p46
      %p49 = scmp.ne.s32.totalorder %s32, %s48
      %p50 = scmp.eq.s32.totalorder %s24, 0
      %p51 = por %p49, %p50
      %s53 = sadd.s32 %s52, 1
      %p56 = scmp.eq.s32.totalorder %s18, 1
      %p57 = scmp.ne.s32.totalorder %s52, %s54
      %p58 = scmp.eq.s32.totalorder %s18, 0
      %p59 = por %p57, %p58
      %p60 = scmp.ne.s32.totalorder %s52, %s54
      %p61 = scmp.eq.s32.totalorder %s23, 1
      %p62 = por %p60, %p61
      %p63 = scmp.ne.s32.totalorder %s54, %s55
      %p64 = scmp.eq.s32.totalorder %s23, 0
      %p65 = por %p63, %p64
      %p66 = scmp.ne.s32.totalorder %s54, %s55
      %p67 = scmp.eq.s32.totalorder %s24, 1
      %p68 = por %p66, %p67
      %p70 = scmp.ne.s32.totalorder %s55, %s69
      %p71 = scmp.eq.s32.totalorder %s24, 0
      %p72 = por %p70, %p71
      %s74 = sadd.s32 %s73, 1
      %p77 = scmp.eq.s32.totalorder %s18, 1
      %p78 = scmp.ne.s32.totalorder %s73, %s75
      %p79 = scmp.eq.s32.totalorder %s18, 0
      %p80 = por %p78, %p79
      %p81 = scmp.ne.s32.totalorder %s73, %s75
      %p82 = scmp.eq.s32.totalorder %s23, 1
      %p83 = por %p81, %p82
      %p84 = scmp.ne.s32.totalorder %s75, %s76
      %p85 = scmp.eq.s32.totalorder %s23, 0
      %p86 = por %p84, %p85
      %p87 = scmp.ne.s32.totalorder %s75, %s76
      %p88 = scmp.eq.s32.totalorder %s24, 1
      %p89 = por %p87, %p88
      %p91 = scmp.ne.s32.totalorder %s76, %s90
      %p92 = scmp.eq.s32.totalorder %s24, 0
      %p93 = por %p91, %p92
      %s95 = sadd.s32 %s94, 1
      %p98 = scmp.eq.s32.totalorder %s18, 1
      %p99 = scmp.ne.s32.totalorder %s94, %s96
      %p100 = scmp.eq.s32.totalorder %s18, 0
      %p101 = por %p99, %p100
      %p102 = scmp.ne.s32.totalorder %s94, %s96
      %p103 = scmp.eq.s32.totalorder %s23, 1
      %p104 = por %p102, %p103
      %p105 = scmp.ne.s32.totalorder %s96, %s97
      %p106 = scmp.eq.s32.totalorder %s23, 0
      %p107 = por %p105, %p106
      %p108 = scmp.ne.s32.totalorder %s96, %s97
      %p109 = scmp.eq.s32.totalorder %s24, 1
      %p110 = por %p108, %p109
      %p112 = scmp.ne.s32.totalorder %s97, %s111
      %p113 = scmp.eq.s32.totalorder %s24, 0
      %p114 = por %p112, %p113
      %s116 = sadd.s32 %s115, 1
      %p119 = scmp.eq.s32.totalorder %s18, 1
      %p120 = scmp.ne.s32.totalorder %s115, %s117
      %p121 = scmp.eq.s32.totalorder %s18, 0
      %p122 = por %p120, %p121
      %p123 = scmp.ne.s32.totalorder %s115, %s117
      %p124 = scmp.eq.s32.totalorder %s23, 1
      %p125 = por %p123, %p124
      %p126 = scmp.ne.s32.totalorder %s117, %s118
      %p127 = scmp.eq.s32.totalorder %s23, 0
      %p128 = por %p126, %p127
      %p129 = scmp.ne.s32.totalorder %s117, %s118
      %p130 = scmp.eq.s32.totalorder %s24, 1
      %p131 = por %p129, %p130
      %p133 = scmp.ne.s32.totalorder %s118, %s132
      %p134 = scmp.eq.s32.totalorder %s24, 0
      %p135 = por %p133, %p134
      %s136 = ssub.s32 %s18, %s25
      %p137 = scmp.eq.s32.totalorder %s136, 0
      %s139 = sadd.s32 %s138, 1
      %s140 = scalar_select %p137, %s138, %s139
      %p143 = pneg %p137
      %p144 = scmp.eq.s32.totalorder %s18, 1
      %p145 = por %p143, %p144
      %p146 = scmp.ne.s32.totalorder %s138, %s141
      %p147 = scmp.eq.s32.totalorder %s18, 0
      %p148 = por %p146, %p147
      %p149 = scmp.ne.s32.totalorder %s138, %s141
      %p150 = scmp.eq.s32.totalorder %s23, 1
      %p151 = por %p149, %p150
      %p152 = scmp.ne.s32.totalorder %s141, %s142
      %p153 = scmp.eq.s32.totalorder %s23, 0
      %p154 = por %p152, %p153
      %p155 = scmp.ne.s32.totalorder %s141, %s142
      %p156 = scmp.eq.s32.totalorder %s24, 1
      %p157 = por %p155, %p156
      %p159 = scmp.ne.s32.totalorder %s142, %s158
      %p160 = scmp.eq.s32.totalorder %s24, 0
      %p161 = por %p159, %p160
      %p162 = scmp.le.s32.totalorder 1, %s18
      %p163 = scmp.lt.s32.totalorder %s18, 3
      %p164 = pnand %p162, %p163
      %p165 = pneg %p164
      // Predicated region
      $region9: #{tpu_custom_call.1} parent=5 // pred_check
        _
      $region10: #{tpu_custom_call.1} parent=5 // pred_check_branch
        %167 = sbr.rel (%p164) target = $region12
      $region11: #{tpu_custom_call.1} parent=5 // pred_region
        %s168 = ssub.s32 %s18, 1
        // Predicated region
        $region13: #{tpu_custom_call.1} parent=11 // pred_check
          %p169 = pneg %p65
        $region14: #{tpu_custom_call.1} parent=11 // pred_check_branch
          %171 = sbr.rel (%p169) target = $region16
        $region15: #{tpu_custom_call.1} parent=11 // pred_region
          %s173 = ssub.s32 512, 512
          %174 = vsyncadd [#allocation6], %s173
          %s175 = sshll.u32 [#allocation5], 4
          %s176 = int_to_ptr.vmem [resolvable:$true] %s175
          %181 = dma.hbm_to_vmem [thread:$0]  %s1, 512, %s176, [#allocation6], 128, 128, 8
        $region16: #{tpu_custom_call.1} parent=11 // pred_fallthru
          _
        // Predicated region
        $region17: #{tpu_custom_call.1} parent=11 // pred_check
          %p182 = pneg %p86
        $region18: #{tpu_custom_call.1} parent=11 // pred_check_branch
          %184 = sbr.rel (%p182) target = $region20
        $region19: #{tpu_custom_call.1} parent=11 // pred_region
          _
        $region20: #{tpu_custom_call.1} parent=11 // pred_fallthru
          _
        // Predicated region
        $region21: #{tpu_custom_call.1} parent=11 // pred_check
          %p185 = pneg %p107
        $region22: #{tpu_custom_call.1} parent=11 // pred_check_branch
          %187 = sbr.rel (%p185) target = $region24
        $region23: #{tpu_custom_call.1} parent=11 // pred_region
          %s189 = ssub.s32 512, 512
          %190 = vsyncadd [#allocation6], %s189
          %s191 = sshll.u32 [#allocation7], 4
          %s192 = int_to_ptr.vmem [resolvable:$true] %s191
          %197 = dma.hbm_to_vmem [thread:$0]  %s3, 512, %s192, [#allocation6], 128, 128, 8
        $region24: #{tpu_custom_call.1} parent=11 // pred_fallthru
          _
        // Predicated region
        $region25: #{tpu_custom_call.1} parent=11 // pred_check
          %p198 = pneg %p128
        $region26: #{tpu_custom_call.1} parent=11 // pred_check_branch
          %200 = sbr.rel (%p198) target = $region28
        $region27: #{tpu_custom_call.1} parent=11 // pred_region
          _
        $region28: #{tpu_custom_call.1} parent=11 // pred_fallthru
          _
      $region12: #{tpu_custom_call.1} parent=5 // pred_fallthru
        _
      %p201 = scmp.lt.s32.totalorder %s18, 2
      // Predicated region
      $region29: #{tpu_custom_call.1} parent=5 // pred_check
        %p202 = pneg %p201
      $region30: #{tpu_custom_call.1} parent=5 // pred_check_branch
        %204 = sbr.rel (%p202) target = $region32
      $region31: #{tpu_custom_call.1} parent=5 // pred_region
        // Predicated region
        $region33: #{tpu_custom_call.1} parent=31 // pred_check
          %p205 = pneg %p38
        $region34: #{tpu_custom_call.1} parent=31 // pred_check_branch
          %207 = sbr.rel (%p205) target = $region36
        $region35: #{tpu_custom_call.1} parent=31 // pred_region
          %s208 = sand.u32 %s28, 1
          %s209 = scalar_lea.sflag [#allocation3], %s208
          %s210 = sand.u32 %s28, 1
          %s211 = smul.addr %s210, 8
          %s212 = scalar_lea.vmem [#allocation2], %s211
          %s214 = ssub.s32 128, 128
          %215 = vsyncadd %s209, %s214
          %s216 = smul.addr %s18, 128
          %s217 = scalar_lea.hbm %s0, %s216
          %s219 = sshll.u32 %s212, 4
          %s220 = int_to_ptr.vmem [resolvable:$true] %s219
          %222 = dma.hbm_to_vmem [thread:$0]  %s217, 128, %s220, %s209
        $region36: #{tpu_custom_call.1} parent=31 // pred_fallthru
          _
      $region32: #{tpu_custom_call.1} parent=5 // pred_fallthru
        _
      %p223 = scmp.le.s32.totalorder 1, %s18
      %p224 = scmp.lt.s32.totalorder %s18, 3
      %p225 = pnand %p223, %p224
      %p226 = pneg %p225
      // Predicated region
      $region37: #{tpu_custom_call.1} parent=5 // pred_check
        _
      $region38: #{tpu_custom_call.1} parent=5 // pred_check_branch
        %228 = sbr.rel (%p225) target = $region40
      $region39: #{tpu_custom_call.1} parent=5 // pred_region
        %s229 = ssub.s32 %s18, 1
        %s230 = sand.u32 %s31, 1
        %s231 = scalar_lea.sflag [#allocation3], %s230
        %s232 = sand.u32 %s31, 1
        %s233 = smul.addr %s232, 8
        %s234 = scalar_lea.vmem [#allocation2], %s233
        // Predicated region
        $region41: #{tpu_custom_call.1} parent=39 // pred_check
          %p235 = pneg %p44
        $region42: #{tpu_custom_call.1} parent=39 // pred_check_branch
          %237 = sbr.rel (%p235) target = $region44
        $region43: #{tpu_custom_call.1} parent=39 // pred_region
          %238 = dma.done %s231, 128
        $region44: #{tpu_custom_call.1} parent=39 // pred_fallthru
          _
        // Predicated region
        $region45: #{tpu_custom_call.1} parent=39 // pred_check
          %p239 = pneg %p65
        $region46: #{tpu_custom_call.1} parent=39 // pred_check_branch
          %241 = sbr.rel (%p239) target = $region48
        $region47: #{tpu_custom_call.1} parent=39 // pred_region
          %242 = dma.done [#allocation6], 512
        $region48: #{tpu_custom_call.1} parent=39 // pred_fallthru
          _
        // Predicated region
        $region49: #{tpu_custom_call.1} parent=39 // pred_check
          %p243 = pneg %p107
        $region50: #{tpu_custom_call.1} parent=39 // pred_check_branch
          %245 = sbr.rel (%p243) target = $region52
        $region51: #{tpu_custom_call.1} parent=39 // pred_region
          %246 = dma.done [#allocation6], 512
        $region52: #{tpu_custom_call.1} parent=39 // pred_fallthru
          _
        %s247 = sand.u32 %s31, 1
        %s248 = scalar_lea.sflag [#allocation3], %s247
        %s249 = sand.u32 %s31, 1
        %s250 = smul.addr %s249, 8
        %s251 = scalar_lea.vmem [#allocation2], %s250
        %p252 = pneg %p44
        %p253 = pneg %p41
        %p254 = pneg %p65
        %p255 = pneg %p62
        %p256 = pneg %p86
        %p257 = pneg %p83
        %p258 = pneg %p107
        %p259 = pneg %p104
        %p260 = pneg %p128
        %p261 = pneg %p125
        %p262 = pneg %p154
        %p263 = pneg %p151
        %s264 = sand.u32 %s141, 1
        %s265 = scalar_lea.sflag [#allocation4], %s264
        %s266 = sand.u32 %s141, 1
        %s267 = smul.addr %s266, 8
        %s268 = scalar_lea.vmem [#allocation8], %s267
        %v269 = vld [vmem:[%s234] sm:$0xff]
        %v270 = vld [vmem:[#allocation5] sm:$0xff]
        %v271 = vld [vmem:[#allocation5 + $0x8] sm:$0xff]
        %v272 = vld [vmem:[#allocation5 + $0x10] sm:$0xff]
        %v273 = vld [vmem:[#allocation5 + $0x18] sm:$0xff]
        %v274 = vld [vmem:[%s2] sm:$0x1]
        %v276 = vlaneseq
        %v277 = vshrl.u32 %v276, 7
        %v278 = vsub.s32 0, %v277
        %v279 = vrot.slane %v274, %v278
        %vm281 = vcmask 261120
        %v283 = vsel %vm281, %v269, 0
        %285 = vmatprep.subr.mxu0 0.0
        %286 = vmatpush1.msra.mxu0 0.0
        %287 = vmatprep.subr.mxu0 0.0
        %288 = vmatpush1.msra.mxu0 0.0
        %289 = vmatprep.subr.mxu0 0.0
        %290 = vmatpush1.msra.mxu0 0.0
        %291 = vmatprep.subr.mxu0 0.0
        %292 = vmatpush1.msra.mxu0 0.0
        %293 = vmatprep.subr.mxu0 0.0
        %294 = vmatpush1.msra.mxu0 0.0
        %295 = vmatprep.subr.mxu0 0.0
        %296 = vmatpush1.msra.mxu0 0.0
        %297 = vmatprep.subr.mxu0 0.0
        %298 = vmatpush1.msra.mxu0 0.0
        %299 = vmatprep.subr.mxu0 0.0
        %300 = vmatpush1.msra.mxu0 0.0
        %301 = vmatprep.subr.mxu0 0.0
        %302 = vmatpush1.msra.mxu0 0.0
        %303 = vmatprep.subr.mxu0 0.0
        %304 = vmatpush1.msra.mxu0 0.0
        %305 = vmatprep.subr.mxu0 0.0
        %306 = vmatpush1.msra.mxu0 0.0
        %307 = vmatprep.subr.mxu0 0.0
        %308 = vmatpush1.msra.mxu0 0.0
        %309 = vmatprep.subr.mxu0 0.0
        %310 = vmatpush1.msra.mxu0 %v273
        %311 = vmatprep.subr.mxu0 0.0
        %312 = vmatpush1.msra.mxu0 %v272
        %313 = vmatprep.subr.mxu0 0.0
        %314 = vmatpush1.msra.mxu0 %v271
        %315 = vmatprep.subr.mxu0 0.0
        %316 = vmatpush1.msra.mxu0 %v270
        %317 = vmatprep.subr.mxu0 0.0
        %318 = vmatpush2.msra.mxu0 0.0
        %319 = vmatprep.subr.mxu0 0.0
        %320 = vmatpush2.msra.mxu0 0.0
        %321 = vmatprep.subr.mxu0 0.0
        %322 = vmatpush2.msra.mxu0 0.0
        %323 = vmatprep.subr.mxu0 0.0
        %324 = vmatpush2.msra.mxu0 0.0
        %325 = vmatprep.subr.mxu0 0.0
        %326 = vmatpush2.msra.mxu0 0.0
        %327 = vmatprep.subr.mxu0 0.0
        %328 = vmatpush2.msra.mxu0 0.0
        %329 = vmatprep.subr.mxu0 0.0
        %330 = vmatpush2.msra.mxu0 0.0
        %331 = vmatprep.subr.mxu0 0.0
        %332 = vmatpush2.msra.mxu0 0.0
        %333 = vmatprep.subr.mxu0 0.0
        %334 = vmatpush2.msra.mxu0 0.0
        %335 = vmatprep.subr.mxu0 0.0
        %336 = vmatpush2.msra.mxu0 0.0
        %337 = vmatprep.subr.mxu0 0.0
        %338 = vmatpush2.msra.mxu0 0.0
        %339 = vmatprep.subr.mxu0 0.0
        %340 = vmatpush2.msra.mxu0 0.0
        %341 = vmatprep.subr.mxu0 0.0
        %342 = vmatpush2.msra.mxu0 0.0
        %343 = vmatprep.subr.mxu0 0.0
        %344 = vmatpush2.msra.mxu0 0.0
        %345 = vmatprep.subr.mxu0 0.0
        %346 = vmatpush2.msra.mxu0 0.0
        %347 = vmatprep.subr.mxu0 0.0
        %348 = vmatpush2.msra.mxu0 0.0
        %349 = vmatprep.mubr.f32.mxu0 0.0
        %350 = vmatmul.mubr.f32.gmra.mxu0 %v283
        %v351 = vpop.f32.mrf.mxu0
        %v352 = vadd.f32 %v279, %v351
        %v353 = vpop.f32.mrf.mxu0
        %354 = vdwg.mxu0
        %v355 = vmul.f32 %v352, 0.35355338
        %357 = vrot.lane.b32.xlu0 %v355, 120
        %v358 = vpop.permute.xlu0 %357
        %359 = vrot.lane.b32.xlu0 %v355, 112
        %v360 = vpop.permute.xlu0 %359
        %361 = vrot.lane.b32.xlu0 %v355, 104
        %v362 = vpop.permute.xlu0 %361
        %364 = vrot.lane.b32.xlu0 %v352, 120
        %v365 = vpop.permute.xlu0 %364
        %366 = vrot.lane.b32.xlu0 %v352, 112
        %v367 = vpop.permute.xlu0 %366
        %368 = vrot.lane.b32.xlu0 %v352, 104
        %v369 = vpop.permute.xlu0 %368
        %v370 = vlaneseq
        %v371 = vshrl.u32 %v370, 7
        %v372 = vlaneseq
        %v373 = vand.u32 %v372, 127
        %vm374 = vcmp.gt.s32.totalorder %v373, %v371
        %375 = vrot.lane.b32.xlu0 %v352, 96
        %v376 = vpop.permute.xlu0 %375
        %vm377 = vcmask 64512
        %v378 = vsel %vm377, %v355, 0
        %v380 = vsel %vm377, %v376, 0
        %382 = vmatprep.subr.mxu0 0.0
        %383 = vmatpush1.xpose.msra.mxu0 0.0
        %384 = vmatprep.subr.mxu0 0.0
        %385 = vmatpush1.xpose.msra.mxu0 0.0
        %386 = vmatprep.subr.mxu0 0.0
        %387 = vmatpush1.xpose.msra.mxu0 0.0
        %388 = vmatprep.subr.mxu0 0.0
        %389 = vmatpush1.xpose.msra.mxu0 0.0
        %390 = vmatprep.subr.mxu0 0.0
        %391 = vmatpush1.xpose.msra.mxu0 0.0
        %392 = vmatprep.subr.mxu0 0.0
        %393 = vmatpush1.xpose.msra.mxu0 0.0
        %394 = vmatprep.subr.mxu0 0.0
        %395 = vmatpush1.xpose.msra.mxu0 0.0
        %396 = vmatprep.subr.mxu0 0.0
        %397 = vmatpush1.xpose.msra.mxu0 0.0
        %398 = vmatprep.subr.mxu0 0.0
        %399 = vmatpush1.xpose.msra.mxu0 0.0
        %400 = vmatprep.subr.mxu0 0.0
        %401 = vmatpush1.xpose.msra.mxu0 0.0
        %402 = vmatprep.subr.mxu0 0.0
        %403 = vmatpush1.xpose.msra.mxu0 0.0
        %404 = vmatprep.subr.mxu0 0.0
        %405 = vmatpush1.xpose.msra.mxu0 0.0
        %406 = vmatprep.subr.mxu0 0.0
        %407 = vmatpush1.xpose.msra.mxu0 0.0
        %408 = vmatprep.subr.mxu0 0.0
        %409 = vmatpush1.xpose.msra.mxu0 0.0
        %410 = vmatprep.subr.mxu0 0.0
        %411 = vmatpush1.xpose.msra.mxu0 0.0
        %412 = vmatprep.subr.mxu0 0.0
        %413 = vmatpush1.xpose.msra.mxu0 %v380
        %414 = vmatprep.subr.mxu0 0.0
        %415 = vmatpush2.xpose.msra.mxu0 0.0
        %416 = vmatprep.subr.mxu0 0.0
        %417 = vmatpush2.xpose.msra.mxu0 0.0
        %418 = vmatprep.subr.mxu0 0.0
        %419 = vmatpush2.xpose.msra.mxu0 0.0
        %420 = vmatprep.subr.mxu0 0.0
        %421 = vmatpush2.xpose.msra.mxu0 0.0
        %422 = vmatprep.subr.mxu0 0.0
        %423 = vmatpush2.xpose.msra.mxu0 0.0
        %424 = vmatprep.subr.mxu0 0.0
        %425 = vmatpush2.xpose.msra.mxu0 0.0
        %426 = vmatprep.subr.mxu0 0.0
        %427 = vmatpush2.xpose.msra.mxu0 0.0
        %428 = vmatprep.subr.mxu0 0.0
        %429 = vmatpush2.xpose.msra.mxu0 0.0
        %430 = vmatprep.subr.mxu0 0.0
        %431 = vmatpush2.xpose.msra.mxu0 0.0
        %432 = vmatprep.subr.mxu0 0.0
        %433 = vmatpush2.xpose.msra.mxu0 0.0
        %434 = vmatprep.subr.mxu0 0.0
        %435 = vmatpush2.xpose.msra.mxu0 0.0
        %436 = vmatprep.subr.mxu0 0.0
        %437 = vmatpush2.xpose.msra.mxu0 0.0
        %438 = vmatprep.subr.mxu0 0.0
        %439 = vmatpush2.xpose.msra.mxu0 0.0
        %440 = vmatprep.subr.mxu0 0.0
        %441 = vmatpush2.xpose.msra.mxu0 0.0
        %442 = vmatprep.subr.mxu0 0.0
        %443 = vmatpush2.xpose.msra.mxu0 0.0
        %444 = vmatprep.subr.mxu0 0.0
        %445 = vmatpush2.xpose.msra.mxu0 0.0
        %446 = vmatprep.mubr.f32.mxu0 0.0
        %447 = vmatmul.mubr.f32.gmra.mxu0 %v378
        %v448 = vpop.f32.mrf.mxu0
        %v449 = vadd.f32 0.0, %v448
        %v450 = vpop.f32.mrf.mxu0
        %451 = vdwg.mxu0
        %452 = vrot.lane.b32.xlu0 %v365, 96
        %v453 = vpop.permute.xlu0 %452
        %v454 = vsel %vm377, %v358, 0
        %v456 = vsel %vm377, %v453, 0
        %458 = vmatprep.subr.mxu0 0.0
        %459 = vmatpush1.xpose.msra.mxu0 0.0
        %460 = vmatprep.subr.mxu0 0.0
        %461 = vmatpush1.xpose.msra.mxu0 0.0
        %462 = vmatprep.subr.mxu0 0.0
        %463 = vmatpush1.xpose.msra.mxu0 0.0
        %464 = vmatprep.subr.mxu0 0.0
        %465 = vmatpush1.xpose.msra.mxu0 0.0
        %466 = vmatprep.subr.mxu0 0.0
        %467 = vmatpush1.xpose.msra.mxu0 0.0
        %468 = vmatprep.subr.mxu0 0.0
        %469 = vmatpush1.xpose.msra.mxu0 0.0
        %470 = vmatprep.subr.mxu0 0.0
        %471 = vmatpush1.xpose.msra.mxu0 0.0
        %472 = vmatprep.subr.mxu0 0.0
        %473 = vmatpush1.xpose.msra.mxu0 0.0
        %474 = vmatprep.subr.mxu0 0.0
        %475 = vmatpush1.xpose.msra.mxu0 0.0
        %476 = vmatprep.subr.mxu0 0.0
        %477 = vmatpush1.xpose.msra.mxu0 0.0
        %478 = vmatprep.subr.mxu0 0.0
        %479 = vmatpush1.xpose.msra.mxu0 0.0
        %480 = vmatprep.subr.mxu0 0.0
        %481 = vmatpush1.xpose.msra.mxu0 0.0
        %482 = vmatprep.subr.mxu0 0.0
        %483 = vmatpush1.xpose.msra.mxu0 0.0
        %484 = vmatprep.subr.mxu0 0.0
        %485 = vmatpush1.xpose.msra.mxu0 0.0
        %486 = vmatprep.subr.mxu0 0.0
        %487 = vmatpush1.xpose.msra.mxu0 0.0
        %488 = vmatprep.subr.mxu0 0.0
        %489 = vmatpush1.xpose.msra.mxu0 %v456
        %490 = vmatprep.subr.mxu0 0.0
        %491 = vmatpush2.xpose.msra.mxu0 0.0
        %492 = vmatprep.subr.mxu0 0.0
        %493 = vmatpush2.xpose.msra.mxu0 0.0
        %494 = vmatprep.subr.mxu0 0.0
        %495 = vmatpush2.xpose.msra.mxu0 0.0
        %496 = vmatprep.subr.mxu0 0.0
        %497 = vmatpush2.xpose.msra.mxu0 0.0
        %498 = vmatprep.subr.mxu0 0.0
        %499 = vmatpush2.xpose.msra.mxu0 0.0
        %500 = vmatprep.subr.mxu0 0.0
        %501 = vmatpush2.xpose.msra.mxu0 0.0
        %502 = vmatprep.subr.mxu0 0.0
        %503 = vmatpush2.xpose.msra.mxu0 0.0
        %504 = vmatprep.subr.mxu0 0.0
        %505 = vmatpush2.xpose.msra.mxu0 0.0
        %506 = vmatprep.subr.mxu0 0.0
        %507 = vmatpush2.xpose.msra.mxu0 0.0
        %508 = vmatprep.subr.mxu0 0.0
        %509 = vmatpush2.xpose.msra.mxu0 0.0
        %510 = vmatprep.subr.mxu0 0.0
        %511 = vmatpush2.xpose.msra.mxu0 0.0
        %512 = vmatprep.subr.mxu0 0.0
        %513 = vmatpush2.xpose.msra.mxu0 0.0
        %514 = vmatprep.subr.mxu0 0.0
        %515 = vmatpush2.xpose.msra.mxu0 0.0
        %516 = vmatprep.subr.mxu0 0.0
        %517 = vmatpush2.xpose.msra.mxu0 0.0
        %518 = vmatprep.subr.mxu0 0.0
        %519 = vmatpush2.xpose.msra.mxu0 0.0
        %520 = vmatprep.subr.mxu0 0.0
        %521 = vmatpush2.xpose.msra.mxu0 0.0
        %522 = vmatprep.mubr.f32.mxu0 0.0
        %523 = vmatmul.mubr.f32.gmra.mxu0 %v454
        %v524 = vpop.f32.mrf.mxu0
        %v525 = vadd.f32 0.0, %v524
        %v526 = vpop.f32.mrf.mxu0
        %527 = vdwg.mxu0
        %528 = vrot.lane.b32.xlu0 %v367, 96
        %v529 = vpop.permute.xlu0 %528
        %v530 = vsel %vm377, %v360, 0
        %v532 = vsel %vm377, %v529, 0
        %534 = vmatprep.subr.mxu0 0.0
        %535 = vmatpush1.xpose.msra.mxu0 0.0
        %536 = vmatprep.subr.mxu0 0.0
        %537 = vmatpush1.xpose.msra.mxu0 0.0
        %538 = vmatprep.subr.mxu0 0.0
        %539 = vmatpush1.xpose.msra.mxu0 0.0
        %540 = vmatprep.subr.mxu0 0.0
        %541 = vmatpush1.xpose.msra.mxu0 0.0
        %542 = vmatprep.subr.mxu0 0.0
        %543 = vmatpush1.xpose.msra.mxu0 0.0
        %544 = vmatprep.subr.mxu0 0.0
        %545 = vmatpush1.xpose.msra.mxu0 0.0
        %546 = vmatprep.subr.mxu0 0.0
        %547 = vmatpush1.xpose.msra.mxu0 0.0
        %548 = vmatprep.subr.mxu0 0.0
        %549 = vmatpush1.xpose.msra.mxu0 0.0
        %550 = vmatprep.subr.mxu0 0.0
        %551 = vmatpush1.xpose.msra.mxu0 0.0
        %552 = vmatprep.subr.mxu0 0.0
        %553 = vmatpush1.xpose.msra.mxu0 0.0
        %554 = vmatprep.subr.mxu0 0.0
        %555 = vmatpush1.xpose.msra.mxu0 0.0
        %556 = vmatprep.subr.mxu0 0.0
        %557 = vmatpush1.xpose.msra.mxu0 0.0
        %558 = vmatprep.subr.mxu0 0.0
        %559 = vmatpush1.xpose.msra.mxu0 0.0
        %560 = vmatprep.subr.mxu0 0.0
        %561 = vmatpush1.xpose.msra.mxu0 0.0
        %562 = vmatprep.subr.mxu0 0.0
        %563 = vmatpush1.xpose.msra.mxu0 0.0
        %564 = vmatprep.subr.mxu0 0.0
        %565 = vmatpush1.xpose.msra.mxu0 %v532
        %566 = vmatprep.subr.mxu0 0.0
        %567 = vmatpush2.xpose.msra.mxu0 0.0
        %568 = vmatprep.subr.mxu0 0.0
        %569 = vmatpush2.xpose.msra.mxu0 0.0
        %570 = vmatprep.subr.mxu0 0.0
        %571 = vmatpush2.xpose.msra.mxu0 0.0
        %572 = vmatprep.subr.mxu0 0.0
        %573 = vmatpush2.xpose.msra.mxu0 0.0
        %574 = vmatprep.subr.mxu0 0.0
        %575 = vmatpush2.xpose.msra.mxu0 0.0
        %576 = vmatprep.subr.mxu0 0.0
        %577 = vmatpush2.xpose.msra.mxu0 0.0
        %578 = vmatprep.subr.mxu0 0.0
        %579 = vmatpush2.xpose.msra.mxu0 0.0
        %580 = vmatprep.subr.mxu0 0.0
        %581 = vmatpush2.xpose.msra.mxu0 0.0
        %582 = vmatprep.subr.mxu0 0.0
        %583 = vmatpush2.xpose.msra.mxu0 0.0
        %584 = vmatprep.subr.mxu0 0.0
        %585 = vmatpush2.xpose.msra.mxu0 0.0
        %586 = vmatprep.subr.mxu0 0.0
        %587 = vmatpush2.xpose.msra.mxu0 0.0
        %588 = vmatprep.subr.mxu0 0.0
        %589 = vmatpush2.xpose.msra.mxu0 0.0
        %590 = vmatprep.subr.mxu0 0.0
        %591 = vmatpush2.xpose.msra.mxu0 0.0
        %592 = vmatprep.subr.mxu0 0.0
        %593 = vmatpush2.xpose.msra.mxu0 0.0
        %594 = vmatprep.subr.mxu0 0.0
        %595 = vmatpush2.xpose.msra.mxu0 0.0
        %596 = vmatprep.subr.mxu0 0.0
        %597 = vmatpush2.xpose.msra.mxu0 0.0
        %598 = vmatprep.mubr.f32.mxu0 0.0
        %599 = vmatmul.mubr.f32.gmra.mxu0 %v530
        %v600 = vpop.f32.mrf.mxu0
        %v601 = vadd.f32 0.0, %v600
        %v602 = vpop.f32.mrf.mxu0
        %603 = vdwg.mxu0
        %604 = vrot.lane.b32.xlu0 %v369, 96
        %v605 = vpop.permute.xlu0 %604
        %v606 = vsel %vm377, %v362, 0
        %v608 = vsel %vm377, %v605, 0
        %610 = vmatprep.subr.mxu0 0.0
        %611 = vmatpush1.xpose.msra.mxu0 0.0
        %612 = vmatprep.subr.mxu0 0.0
        %613 = vmatpush1.xpose.msra.mxu0 0.0
        %614 = vmatprep.subr.mxu0 0.0
        %615 = vmatpush1.xpose.msra.mxu0 0.0
        %616 = vmatprep.subr.mxu0 0.0
        %617 = vmatpush1.xpose.msra.mxu0 0.0
        %618 = vmatprep.subr.mxu0 0.0
        %619 = vmatpush1.xpose.msra.mxu0 0.0
        %620 = vmatprep.subr.mxu0 0.0
        %621 = vmatpush1.xpose.msra.mxu0 0.0
        %622 = vmatprep.subr.mxu0 0.0
        %623 = vmatpush1.xpose.msra.mxu0 0.0
        %624 = vmatprep.subr.mxu0 0.0
        %625 = vmatpush1.xpose.msra.mxu0 0.0
        %626 = vmatprep.subr.mxu0 0.0
        %627 = vmatpush1.xpose.msra.mxu0 0.0
        %628 = vmatprep.subr.mxu0 0.0
        %629 = vmatpush1.xpose.msra.mxu0 0.0
        %630 = vmatprep.subr.mxu0 0.0
        %631 = vmatpush1.xpose.msra.mxu0 0.0
        %632 = vmatprep.subr.mxu0 0.0
        %633 = vmatpush1.xpose.msra.mxu0 0.0
        %634 = vmatprep.subr.mxu0 0.0
        %635 = vmatpush1.xpose.msra.mxu0 0.0
        %636 = vmatprep.subr.mxu0 0.0
        %637 = vmatpush1.xpose.msra.mxu0 0.0
        %638 = vmatprep.subr.mxu0 0.0
        %639 = vmatpush1.xpose.msra.mxu0 0.0
        %640 = vmatprep.subr.mxu0 0.0
        %641 = vmatpush1.xpose.msra.mxu0 %v608
        %642 = vmatprep.subr.mxu0 0.0
        %643 = vmatpush2.xpose.msra.mxu0 0.0
        %644 = vmatprep.subr.mxu0 0.0
        %645 = vmatpush2.xpose.msra.mxu0 0.0
        %646 = vmatprep.subr.mxu0 0.0
        %647 = vmatpush2.xpose.msra.mxu0 0.0
        %648 = vmatprep.subr.mxu0 0.0
        %649 = vmatpush2.xpose.msra.mxu0 0.0
        %650 = vmatprep.subr.mxu0 0.0
        %651 = vmatpush2.xpose.msra.mxu0 0.0
        %652 = vmatprep.subr.mxu0 0.0
        %653 = vmatpush2.xpose.msra.mxu0 0.0
        %654 = vmatprep.subr.mxu0 0.0
        %655 = vmatpush2.xpose.msra.mxu0 0.0
        %656 = vmatprep.subr.mxu0 0.0
        %657 = vmatpush2.xpose.msra.mxu0 0.0
        %658 = vmatprep.subr.mxu0 0.0
        %659 = vmatpush2.xpose.msra.mxu0 0.0
        %660 = vmatprep.subr.mxu0 0.0
        %661 = vmatpush2.xpose.msra.mxu0 0.0
        %662 = vmatprep.subr.mxu0 0.0
        %663 = vmatpush2.xpose.msra.mxu0 0.0
        %664 = vmatprep.subr.mxu0 0.0
        %665 = vmatpush2.xpose.msra.mxu0 0.0
        %666 = vmatprep.subr.mxu0 0.0
        %667 = vmatpush2.xpose.msra.mxu0 0.0
        %668 = vmatprep.subr.mxu0 0.0
        %669 = vmatpush2.xpose.msra.mxu0 0.0
        %670 = vmatprep.subr.mxu0 0.0
        %671 = vmatpush2.xpose.msra.mxu0 0.0
        %672 = vmatprep.subr.mxu0 0.0
        %673 = vmatpush2.xpose.msra.mxu0 0.0
        %674 = vmatprep.mubr.f32.mxu0 0.0
        %675 = vmatmul.mubr.f32.gmra.mxu0 %v606
        %v676 = vpop.f32.mrf.mxu0
        %v677 = vadd.f32 0.0, %v676
        %v678 = vpop.f32.mrf.mxu0
        %679 = vdwg.mxu0
        %v680 = vsel %vm374, 1, 0
        %vm681 = vcmp.eq.s32.totalorder %v680, 1
        %v682 = vsel %vm681, -inf, %v449
        %v683 = vsel %vm681, -inf, %v525
        %v684 = vsel %vm681, -inf, %v601
        %v685 = vsel %vm681, -inf, %v677
        %v686 = vsel %vm377, %v682, -inf
        %687 = vmax.xlane.f32.xlu0 %v686
        %v688 = vpop.xlane.xlu0 %687
        %v689 = vsel %vm377, %v683, -inf
        %690 = vmax.xlane.f32.xlu0 %v689
        %v691 = vpop.xlane.xlu0 %690
        %v692 = vsel %vm377, %v684, -inf
        %693 = vmax.xlane.f32.xlu0 %v692
        %v694 = vpop.xlane.xlu0 %693
        %v695 = vsel %vm377, %v685, -inf
        %696 = vmax.xlane.f32.xlu0 %v695
        %v697 = vpop.xlane.xlu0 %696
        %v698 = vsub.f32 %v682, %v688
        %v699 = vsub.f32 %v683, %v691
        %v700 = vsub.f32 %v684, %v694
        %v701 = vsub.f32 %v685, %v697
        %v702 = vmul.f32 %v698, 1.442695
        %v703 = vpow.pop %v702
        %v704 = vmul.f32 %v699, 1.442695
        %v705 = vpow.pop %v704
        %v706 = vmul.f32 %v700, 1.442695
        %v707 = vpow.pop %v706
        %v708 = vmul.f32 %v701, 1.442695
        %v709 = vpow.pop %v708
        %v710 = vsel %vm377, %v703, 0.0
        %711 = vadd.xlane.f32.xlu0 %v710
        %v712 = vpop.xlane.xlu0 %711
        %v713 = vsel %vm377, %v705, 0.0
        %714 = vadd.xlane.f32.xlu0 %v713
        %v715 = vpop.xlane.xlu0 %714
        %v716 = vsel %vm377, %v707, 0.0
        %717 = vadd.xlane.f32.xlu0 %v716
        %v718 = vpop.xlane.xlu0 %717
        %v719 = vsel %vm377, %v709, 0.0
        %720 = vadd.xlane.f32.xlu0 %v719
        %v721 = vpop.xlane.xlu0 %720
        %v722 = vrcp.pop %v712
        %v723 = vrcp.pop %v715
        %v724 = vrcp.pop %v718
        %v725 = vrcp.pop %v721
        %v726 = vmul.f32 %v712, %v722
        %v727 = vmul.f32 %v715, %v723
        %v728 = vmul.f32 %v718, %v724
        %v729 = vmul.f32 %v721, %v725
        %v730 = vsub.f32 2.0, %v726
        %v731 = vsub.f32 2.0, %v727
        %v732 = vsub.f32 2.0, %v728
        %v733 = vsub.f32 2.0, %v729
        %v734 = vmul.f32 %v722, %v730
        %v735 = vmul.f32 %v723, %v731
        %v736 = vmul.f32 %v724, %v732
        %v737 = vmul.f32 %v725, %v733
        %v738 = vmul.f32 %v703, %v734
        %v739 = vmul.f32 %v705, %v735
        %v740 = vmul.f32 %v707, %v736
        %v741 = vmul.f32 %v709, %v737
        %742 = vrot.lane.b32.xlu0 %v352, 64
        %v743 = vpop.permute.xlu0 %742
        %v746 = vsel %vm377, %v738, 0
        %748 = vmatprep.subr.mxu0 0.0
        %749 = vmatpush1.msra.mxu0 0.0
        %750 = vmatprep.subr.mxu0 0.0
        %751 = vmatpush1.msra.mxu0 0.0
        %752 = vmatprep.subr.mxu0 0.0
        %753 = vmatpush1.msra.mxu0 0.0
        %754 = vmatprep.subr.mxu0 0.0
        %755 = vmatpush1.msra.mxu0 0.0
        %756 = vmatprep.subr.mxu0 0.0
        %757 = vmatpush1.msra.mxu0 0.0
        %758 = vmatprep.subr.mxu0 0.0
        %759 = vmatpush1.msra.mxu0 0.0
        %760 = vmatprep.subr.mxu0 0.0
        %761 = vmatpush1.msra.mxu0 0.0
        %762 = vmatprep.subr.mxu0 0.0
        %763 = vmatpush1.msra.mxu0 0.0
        %764 = vmatprep.subr.mxu0 0.0
        %765 = vmatpush1.msra.mxu0 0.0
        %766 = vmatprep.subr.mxu0 0.0
        %767 = vmatpush1.msra.mxu0 0.0
        %768 = vmatprep.subr.mxu0 0.0
        %769 = vmatpush1.msra.mxu0 0.0
        %770 = vmatprep.subr.mxu0 0.0
        %771 = vmatpush1.msra.mxu0 0.0
        %772 = vmatprep.subr.mxu0 0.0
        %773 = vmatpush1.msra.mxu0 0.0
        %774 = vmatprep.subr.mxu0 0.0
        %775 = vmatpush1.msra.mxu0 0.0
        %776 = vmatprep.subr.mxu0 0.0
        %777 = vmatpush1.msra.mxu0 0.0
        %778 = vmatprep.subr.mxu0 0.0
        %779 = vmatpush1.msra.mxu0 %v743
        %780 = vmatprep.subr.mxu0 0.0
        %781 = vmatpush2.msra.mxu0 0.0
        %782 = vmatprep.subr.mxu0 0.0
        %783 = vmatpush2.msra.mxu0 0.0
        %784 = vmatprep.subr.mxu0 0.0
        %785 = vmatpush2.msra.mxu0 0.0
        %786 = vmatprep.subr.mxu0 0.0
        %787 = vmatpush2.msra.mxu0 0.0
        %788 = vmatprep.subr.mxu0 0.0
        %789 = vmatpush2.msra.mxu0 0.0
        %790 = vmatprep.subr.mxu0 0.0
        %791 = vmatpush2.msra.mxu0 0.0
        %792 = vmatprep.subr.mxu0 0.0
        %793 = vmatpush2.msra.mxu0 0.0
        %794 = vmatprep.subr.mxu0 0.0
        %795 = vmatpush2.msra.mxu0 0.0
        %796 = vmatprep.subr.mxu0 0.0
        %797 = vmatpush2.msra.mxu0 0.0
        %798 = vmatprep.subr.mxu0 0.0
        %799 = vmatpush2.msra.mxu0 0.0
        %800 = vmatprep.subr.mxu0 0.0
        %801 = vmatpush2.msra.mxu0 0.0
        %802 = vmatprep.subr.mxu0 0.0
        %803 = vmatpush2.msra.mxu0 0.0
        %804 = vmatprep.subr.mxu0 0.0
        %805 = vmatpush2.msra.mxu0 0.0
        %806 = vmatprep.subr.mxu0 0.0
        %807 = vmatpush2.msra.mxu0 0.0
        %808 = vmatprep.subr.mxu0 0.0
        %809 = vmatpush2.msra.mxu0 0.0
        %810 = vmatprep.subr.mxu0 0.0
        %811 = vmatpush2.msra.mxu0 0.0
        %812 = vmatprep.mubr.f32.mxu0 0.0
        %813 = vmatmul.mubr.f32.gmra.mxu0 %v746
        %v814 = vpop.f32.mrf.mxu0
        %v815 = vadd.f32 0.0, %v814
        %v816 = vpop.f32.mrf.mxu0
        %817 = vdwg.mxu0
        %818 = vrot.lane.b32.xlu0 %v365, 64
        %v819 = vpop.permute.xlu0 %818
        %v822 = vsel %vm377, %v739, 0
        %824 = vmatprep.subr.mxu0 0.0
        %825 = vmatpush1.msra.mxu0 0.0
        %826 = vmatprep.subr.mxu0 0.0
        %827 = vmatpush1.msra.mxu0 0.0
        %828 = vmatprep.subr.mxu0 0.0
        %829 = vmatpush1.msra.mxu0 0.0
        %830 = vmatprep.subr.mxu0 0.0
        %831 = vmatpush1.msra.mxu0 0.0
        %832 = vmatprep.subr.mxu0 0.0
        %833 = vmatpush1.msra.mxu0 0.0
        %834 = vmatprep.subr.mxu0 0.0
        %835 = vmatpush1.msra.mxu0 0.0
        %836 = vmatprep.subr.mxu0 0.0
        %837 = vmatpush1.msra.mxu0 0.0
        %838 = vmatprep.subr.mxu0 0.0
        %839 = vmatpush1.msra.mxu0 0.0
        %840 = vmatprep.subr.mxu0 0.0
        %841 = vmatpush1.msra.mxu0 0.0
        %842 = vmatprep.subr.mxu0 0.0
        %843 = vmatpush1.msra.mxu0 0.0
        %844 = vmatprep.subr.mxu0 0.0
        %845 = vmatpush1.msra.mxu0 0.0
        %846 = vmatprep.subr.mxu0 0.0
        %847 = vmatpush1.msra.mxu0 0.0
        %848 = vmatprep.subr.mxu0 0.0
        %849 = vmatpush1.msra.mxu0 0.0
        %850 = vmatprep.subr.mxu0 0.0
        %851 = vmatpush1.msra.mxu0 0.0
        %852 = vmatprep.subr.mxu0 0.0
        %853 = vmatpush1.msra.mxu0 0.0
        %854 = vmatprep.subr.mxu0 0.0
        %855 = vmatpush1.msra.mxu0 %v819
        %856 = vmatprep.subr.mxu0 0.0
        %857 = vmatpush2.msra.mxu0 0.0
        %858 = vmatprep.subr.mxu0 0.0
        %859 = vmatpush2.msra.mxu0 0.0
        %860 = vmatprep.subr.mxu0 0.0
        %861 = vmatpush2.msra.mxu0 0.0
        %862 = vmatprep.subr.mxu0 0.0
        %863 = vmatpush2.msra.mxu0 0.0
        %864 = vmatprep.subr.mxu0 0.0
        %865 = vmatpush2.msra.mxu0 0.0
        %866 = vmatprep.subr.mxu0 0.0
        %867 = vmatpush2.msra.mxu0 0.0
        %868 = vmatprep.subr.mxu0 0.0
        %869 = vmatpush2.msra.mxu0 0.0
        %870 = vmatprep.subr.mxu0 0.0
        %871 = vmatpush2.msra.mxu0 0.0
        %872 = vmatprep.subr.mxu0 0.0
        %873 = vmatpush2.msra.mxu0 0.0
        %874 = vmatprep.subr.mxu0 0.0
        %875 = vmatpush2.msra.mxu0 0.0
        %876 = vmatprep.subr.mxu0 0.0
        %877 = vmatpush2.msra.mxu0 0.0
        %878 = vmatprep.subr.mxu0 0.0
        %879 = vmatpush2.msra.mxu0 0.0
        %880 = vmatprep.subr.mxu0 0.0
        %881 = vmatpush2.msra.mxu0 0.0
        %882 = vmatprep.subr.mxu0 0.0
        %883 = vmatpush2.msra.mxu0 0.0
        %884 = vmatprep.subr.mxu0 0.0
        %885 = vmatpush2.msra.mxu0 0.0
        %886 = vmatprep.subr.mxu0 0.0
        %887 = vmatpush2.msra.mxu0 0.0
        %888 = vmatprep.mubr.f32.mxu0 0.0
        %889 = vmatmul.mubr.f32.gmra.mxu0 %v822
        %v890 = vpop.f32.mrf.mxu0
        %v891 = vadd.f32 0.0, %v890
        %v892 = vpop.f32.mrf.mxu0
        %893 = vdwg.mxu0
        %894 = vrot.lane.b32.xlu0 %v367, 64
        %v895 = vpop.permute.xlu0 %894
        %v898 = vsel %vm377, %v740, 0
        %900 = vmatprep.subr.mxu0 0.0
        %901 = vmatpush1.msra.mxu0 0.0
        %902 = vmatprep.subr.mxu0 0.0
        %903 = vmatpush1.msra.mxu0 0.0
        %904 = vmatprep.subr.mxu0 0.0
        %905 = vmatpush1.msra.mxu0 0.0
        %906 = vmatprep.subr.mxu0 0.0
        %907 = vmatpush1.msra.mxu0 0.0
        %908 = vmatprep.subr.mxu0 0.0
        %909 = vmatpush1.msra.mxu0 0.0
        %910 = vmatprep.subr.mxu0 0.0
        %911 = vmatpush1.msra.mxu0 0.0
        %912 = vmatprep.subr.mxu0 0.0
        %913 = vmatpush1.msra.mxu0 0.0
        %914 = vmatprep.subr.mxu0 0.0
        %915 = vmatpush1.msra.mxu0 0.0
        %916 = vmatprep.subr.mxu0 0.0
        %917 = vmatpush1.msra.mxu0 0.0
        %918 = vmatprep.subr.mxu0 0.0
        %919 = vmatpush1.msra.mxu0 0.0
        %920 = vmatprep.subr.mxu0 0.0
        %921 = vmatpush1.msra.mxu0 0.0
        %922 = vmatprep.subr.mxu0 0.0
        %923 = vmatpush1.msra.mxu0 0.0
        %924 = vmatprep.subr.mxu0 0.0
        %925 = vmatpush1.msra.mxu0 0.0
        %926 = vmatprep.subr.mxu0 0.0
        %927 = vmatpush1.msra.mxu0 0.0
        %928 = vmatprep.subr.mxu0 0.0
        %929 = vmatpush1.msra.mxu0 0.0
        %930 = vmatprep.subr.mxu0 0.0
        %931 = vmatpush1.msra.mxu0 %v895
        %932 = vmatprep.subr.mxu0 0.0
        %933 = vmatpush2.msra.mxu0 0.0
        %934 = vmatprep.subr.mxu0 0.0
        %935 = vmatpush2.msra.mxu0 0.0
        %936 = vmatprep.subr.mxu0 0.0
        %937 = vmatpush2.msra.mxu0 0.0
        %938 = vmatprep.subr.mxu0 0.0
        %939 = vmatpush2.msra.mxu0 0.0
        %940 = vmatprep.subr.mxu0 0.0
        %941 = vmatpush2.msra.mxu0 0.0
        %942 = vmatprep.subr.mxu0 0.0
        %943 = vmatpush2.msra.mxu0 0.0
        %944 = vmatprep.subr.mxu0 0.0
        %945 = vmatpush2.msra.mxu0 0.0
        %946 = vmatprep.subr.mxu0 0.0
        %947 = vmatpush2.msra.mxu0 0.0
        %948 = vmatprep.subr.mxu0 0.0
        %949 = vmatpush2.msra.mxu0 0.0
        %950 = vmatprep.subr.mxu0 0.0
        %951 = vmatpush2.msra.mxu0 0.0
        %952 = vmatprep.subr.mxu0 0.0
        %953 = vmatpush2.msra.mxu0 0.0
        %954 = vmatprep.subr.mxu0 0.0
        %955 = vmatpush2.msra.mxu0 0.0
        %956 = vmatprep.subr.mxu0 0.0
        %957 = vmatpush2.msra.mxu0 0.0
        %958 = vmatprep.subr.mxu0 0.0
        %959 = vmatpush2.msra.mxu0 0.0
        %960 = vmatprep.subr.mxu0 0.0
        %961 = vmatpush2.msra.mxu0 0.0
        %962 = vmatprep.subr.mxu0 0.0
        %963 = vmatpush2.msra.mxu0 0.0
        %964 = vmatprep.mubr.f32.mxu0 0.0
        %965 = vmatmul.mubr.f32.gmra.mxu0 %v898
        %v966 = vpop.f32.mrf.mxu0
        %v967 = vadd.f32 0.0, %v966
        %v968 = vpop.f32.mrf.mxu0
        %969 = vdwg.mxu0
        %970 = vrot.lane.b32.xlu0 %v369, 64
        %v971 = vpop.permute.xlu0 %970
        %v974 = vsel %vm377, %v741, 0
        %976 = vmatprep.subr.mxu0 0.0
        %977 = vmatpush1.msra.mxu0 0.0
        %978 = vmatprep.subr.mxu0 0.0
        %979 = vmatpush1.msra.mxu0 0.0
        %980 = vmatprep.subr.mxu0 0.0
        %981 = vmatpush1.msra.mxu0 0.0
        %982 = vmatprep.subr.mxu0 0.0
        %983 = vmatpush1.msra.mxu0 0.0
        %984 = vmatprep.subr.mxu0 0.0
        %985 = vmatpush1.msra.mxu0 0.0
        %986 = vmatprep.subr.mxu0 0.0
        %987 = vmatpush1.msra.mxu0 0.0
        %988 = vmatprep.subr.mxu0 0.0
        %989 = vmatpush1.msra.mxu0 0.0
        %990 = vmatprep.subr.mxu0 0.0
        %991 = vmatpush1.msra.mxu0 0.0
        %992 = vmatprep.subr.mxu0 0.0
        %993 = vmatpush1.msra.mxu0 0.0
        %994 = vmatprep.subr.mxu0 0.0
        %995 = vmatpush1.msra.mxu0 0.0
        %996 = vmatprep.subr.mxu0 0.0
        %997 = vmatpush1.msra.mxu0 0.0
        %998 = vmatprep.subr.mxu0 0.0
        %999 = vmatpush1.msra.mxu0 0.0
        %1000 = vmatprep.subr.mxu0 0.0
        %1001 = vmatpush1.msra.mxu0 0.0
        %1002 = vmatprep.subr.mxu0 0.0
        %1003 = vmatpush1.msra.mxu0 0.0
        %1004 = vmatprep.subr.mxu0 0.0
        %1005 = vmatpush1.msra.mxu0 0.0
        %1006 = vmatprep.subr.mxu0 0.0
        %1007 = vmatpush1.msra.mxu0 %v971
        %1008 = vmatprep.subr.mxu0 0.0
        %1009 = vmatpush2.msra.mxu0 0.0
        %1010 = vmatprep.subr.mxu0 0.0
        %1011 = vmatpush2.msra.mxu0 0.0
        %1012 = vmatprep.subr.mxu0 0.0
        %1013 = vmatpush2.msra.mxu0 0.0
        %1014 = vmatprep.subr.mxu0 0.0
        %1015 = vmatpush2.msra.mxu0 0.0
        %1016 = vmatprep.subr.mxu0 0.0
        %1017 = vmatpush2.msra.mxu0 0.0
        %1018 = vmatprep.subr.mxu0 0.0
        %1019 = vmatpush2.msra.mxu0 0.0
        %1020 = vmatprep.subr.mxu0 0.0
        %1021 = vmatpush2.msra.mxu0 0.0
        %1022 = vmatprep.subr.mxu0 0.0
        %1023 = vmatpush2.msra.mxu0 0.0
        %1024 = vmatprep.subr.mxu0 0.0
        %1025 = vmatpush2.msra.mxu0 0.0
        %1026 = vmatprep.subr.mxu0 0.0
        %1027 = vmatpush2.msra.mxu0 0.0
        %1028 = vmatprep.subr.mxu0 0.0
        %1029 = vmatpush2.msra.mxu0 0.0
        %1030 = vmatprep.subr.mxu0 0.0
        %1031 = vmatpush2.msra.mxu0 0.0
        %1032 = vmatprep.subr.mxu0 0.0
        %1033 = vmatpush2.msra.mxu0 0.0
        %1034 = vmatprep.subr.mxu0 0.0
        %1035 = vmatpush2.msra.mxu0 0.0
        %1036 = vmatprep.subr.mxu0 0.0
        %1037 = vmatpush2.msra.mxu0 0.0
        %1038 = vmatprep.subr.mxu0 0.0
        %1039 = vmatpush2.msra.mxu0 0.0
        %1040 = vmatprep.mubr.f32.mxu0 0.0
        %1041 = vmatmul.mubr.f32.gmra.mxu0 %v974
        %v1042 = vpop.f32.mrf.mxu0
        %v1043 = vadd.f32 0.0, %v1042
        %v1044 = vpop.f32.mrf.mxu0
        %1045 = vdwg.mxu0
        %1047 = vrot.lane.b32.xlu0 %v891, 8
        %v1048 = vpop.permute.xlu0 %1047
        %1051 = vrot.lane.b32.xlu0 %v967, 16
        %v1052 = vpop.permute.xlu0 %1051
        %1055 = vrot.lane.b32.xlu0 %v1043, 24
        %v1056 = vpop.permute.xlu0 %1055
        %v1058 = vsel %vm377, %v815, %v1048
        %vm1059 = vcmask 130048
        %v1060 = vsel %vm1059, %v1058, %v1052
        %vm1061 = vcmask 195584
        %v1062 = vsel %vm1061, %v1060, %v1056
        %v1063 = vld [vmem:[#allocation7] sm:$0xff]
        %v1064 = vld [vmem:[#allocation7 + $0x8] sm:$0xff]
        %v1065 = vld [vmem:[#allocation7 + $0x10] sm:$0xff]
        %v1066 = vld [vmem:[#allocation7 + $0x18] sm:$0xff]
        %v1067 = vld [vmem:[%s4] sm:$0x1]
        %v1069 = vlaneseq
        %v1070 = vshrl.u32 %v1069, 7
        %v1071 = vsub.s32 0, %v1070
        %v1072 = vrot.slane %v1067, %v1071
        %v1075 = vsel %vm281, %v1062, 0
        %1077 = vmatprep.subr.mxu0 0.0
        %1078 = vmatpush1.msra.mxu0 0.0
        %1079 = vmatprep.subr.mxu0 0.0
        %1080 = vmatpush1.msra.mxu0 0.0
        %1081 = vmatprep.subr.mxu0 0.0
        %1082 = vmatpush1.msra.mxu0 0.0
        %1083 = vmatprep.subr.mxu0 0.0
        %1084 = vmatpush1.msra.mxu0 0.0
        %1085 = vmatprep.subr.mxu0 0.0
        %1086 = vmatpush1.msra.mxu0 0.0
        %1087 = vmatprep.subr.mxu0 0.0
        %1088 = vmatpush1.msra.mxu0 0.0
        %1089 = vmatprep.subr.mxu0 0.0
        %1090 = vmatpush1.msra.mxu0 0.0
        %1091 = vmatprep.subr.mxu0 0.0
        %1092 = vmatpush1.msra.mxu0 0.0
        %1093 = vmatprep.subr.mxu0 0.0
        %1094 = vmatpush1.msra.mxu0 0.0
        %1095 = vmatprep.subr.mxu0 0.0
        %1096 = vmatpush1.msra.mxu0 0.0
        %1097 = vmatprep.subr.mxu0 0.0
        %1098 = vmatpush1.msra.mxu0 0.0
        %1099 = vmatprep.subr.mxu0 0.0
        %1100 = vmatpush1.msra.mxu0 0.0
        %1101 = vmatprep.subr.mxu0 0.0
        %1102 = vmatpush1.msra.mxu0 %v1066
        %1103 = vmatprep.subr.mxu0 0.0
        %1104 = vmatpush1.msra.mxu0 %v1065
        %1105 = vmatprep.subr.mxu0 0.0
        %1106 = vmatpush1.msra.mxu0 %v1064
        %1107 = vmatprep.subr.mxu0 0.0
        %1108 = vmatpush1.msra.mxu0 %v1063
        %1109 = vmatprep.subr.mxu0 0.0
        %1110 = vmatpush2.msra.mxu0 0.0
        %1111 = vmatprep.subr.mxu0 0.0
        %1112 = vmatpush2.msra.mxu0 0.0
        %1113 = vmatprep.subr.mxu0 0.0
        %1114 = vmatpush2.msra.mxu0 0.0
        %1115 = vmatprep.subr.mxu0 0.0
        %1116 = vmatpush2.msra.mxu0 0.0
        %1117 = vmatprep.subr.mxu0 0.0
        %1118 = vmatpush2.msra.mxu0 0.0
        %1119 = vmatprep.subr.mxu0 0.0
        %1120 = vmatpush2.msra.mxu0 0.0
        %1121 = vmatprep.subr.mxu0 0.0
        %1122 = vmatpush2.msra.mxu0 0.0
        %1123 = vmatprep.subr.mxu0 0.0
        %1124 = vmatpush2.msra.mxu0 0.0
        %1125 = vmatprep.subr.mxu0 0.0
        %1126 = vmatpush2.msra.mxu0 0.0
        %1127 = vmatprep.subr.mxu0 0.0
        %1128 = vmatpush2.msra.mxu0 0.0
        %1129 = vmatprep.subr.mxu0 0.0
        %1130 = vmatpush2.msra.mxu0 0.0
        %1131 = vmatprep.subr.mxu0 0.0
        %1132 = vmatpush2.msra.mxu0 0.0
        %1133 = vmatprep.subr.mxu0 0.0
        %1134 = vmatpush2.msra.mxu0 0.0
        %1135 = vmatprep.subr.mxu0 0.0
        %1136 = vmatpush2.msra.mxu0 0.0
        %1137 = vmatprep.subr.mxu0 0.0
        %1138 = vmatpush2.msra.mxu0 0.0
        %1139 = vmatprep.subr.mxu0 0.0
        %1140 = vmatpush2.msra.mxu0 0.0
        %1141 = vmatprep.mubr.f32.mxu0 0.0
        %1142 = vmatmul.mubr.f32.gmra.mxu0 %v1075
        %v1143 = vpop.f32.mrf.mxu0
        %v1144 = vadd.f32 %v1072, %v1143
        %v1145 = vpop.f32.mrf.mxu0
        %1146 = vdwg.mxu0
        %1147 = vst.msk [vmem:[%s268] sm:$0xff] %vm281, %v1144
        %s1148 = sand.u32 %s141, 1
        %s1149 = scalar_lea.sflag [#allocation4], %s1148
        %s1150 = sand.u32 %s141, 1
        %s1151 = smul.addr %s1150, 8
        %s1152 = scalar_lea.vmem [#allocation8], %s1151
        // Predicated region
        $region53: #{tpu_custom_call.1} parent=39 // pred_check
          %p1153 = pneg %p151
        $region54: #{tpu_custom_call.1} parent=39 // pred_check_branch
          %1155 = sbr.rel (%p1153) target = $region56
        $region55: #{tpu_custom_call.1} parent=39 // pred_region
          %s1157 = ssub.s32 128, 128
          %1158 = vsyncadd %s1149, %s1157
          %s1159 = smul.addr %s23, 128
          %s1160 = scalar_lea.hbm %s5, %s1159
          %s1162 = sshll.u32 %s1152, 4
          %s1163 = int_to_ptr.vmem [resolvable:$true] %s1162
          %1165 = dma.vmem_to_hbm [thread:$0]  %s1163, 128, %s1160, %s1149
        $region56: #{tpu_custom_call.1} parent=39 // pred_fallthru
          _
      $region40: #{tpu_custom_call.1} parent=5 // pred_fallthru
        _
      %p1166 = scmp.le.s32.totalorder 2, %s18
      // Predicated region
      $region57: #{tpu_custom_call.1} parent=5 // pred_check
        %p1167 = pneg %p1166
      $region58: #{tpu_custom_call.1} parent=5 // pred_check_branch
        %1169 = sbr.rel (%p1167) target = $region60
      $region59: #{tpu_custom_call.1} parent=5 // pred_region
        %s1170 = ssub.s32 %s18, 2
        // Predicated region
        $region61: #{tpu_custom_call.1} parent=59 // pred_check
          %p1171 = pneg %p157
        $region62: #{tpu_custom_call.1} parent=59 // pred_check_branch
          %1173 = sbr.rel (%p1171) target = $region64
        $region63: #{tpu_custom_call.1} parent=59 // pred_region
          %s1174 = sand.u32 %s142, 1
          %s1175 = scalar_lea.sflag [#allocation4], %s1174
          %s1176 = sand.u32 %s142, 1
          %s1177 = smul.addr %s1176, 8
          %s1178 = scalar_lea.vmem [#allocation8], %s1177
          %1179 = dma.done %s1175, 128
        $region64: #{tpu_custom_call.1} parent=59 // pred_fallthru
          _
      $region60: #{tpu_custom_call.1} parent=5 // pred_fallthru
        _
    $region6: #{tpu_custom_call.1} parent=1 // loop_footer
      %s22 = sadd.s32 1, %s18
    $region7: #{tpu_custom_call.1} parent=1 // loop_footer_branch
      %17 = sbr.rel target = $region3
    $region8: #{tpu_custom_call.1} parent=1 // loop_exit
      _
    %1180 = vsyncpa [#allocation3], 1
    %s1181 = scalar_lea.sflag [#allocation3], 1
    %1182 = vsyncpa %s1181, 1
    %1183 = vsyncpa [#allocation6], 1
    %1184 = vsyncpa [#allocation4], 1
    %s1185 = scalar_lea.sflag [#allocation4], 1
    %1186 = vsyncpa %s1185, 1

</llo_original>
